<compile_context>
chip_gen: v7x
topology: tpu7x:2x2x1
jax: 0.10.0
libtpu: 0.0.40
codegen_flags: <defaults>
</compile_context>

<pallas_src>
import jax
import jax.numpy as jnp
from jax.experimental import pallas as pl
from jax.experimental.pallas import tpu as pltpu

_LANES = 128


def _sigmoid_kernel(x_ref, o_ref):
    # Elementwise sigmoid on the whole VMEM tile.
    # Explicit f32 compute keeps lowering identical across v5e/v6e/v7x.
    x = x_ref[...].astype(jnp.float32)
    o_ref[...] = jax.nn.sigmoid(x).astype(o_ref.dtype)


def sigmoid_pallas(x: jnp.ndarray, *, tile_rows: int = 4096) -> jnp.ndarray:
    """Elementwise sigmoid matching torch.nn.Sigmoid()(x) for any shape/dtype."""
    orig_shape = x.shape
    orig_dtype = x.dtype

    flat = x.reshape(-1)
    n = flat.shape[0]

    # Tiny pad (< 128 elems) only when n is not lane-aligned; otherwise the
    # reshape below is layout-free and we avoid any extra HBM pass.
    rem = n % _LANES
    needs_pad = rem != 0
    if needs_pad:
        flat = jnp.pad(flat, (0, _LANES - rem))

    rows = flat.shape[0] // _LANES
    x2d = flat.reshape(rows, _LANES)

    # Clamp the tile so tiny inputs don't allocate oversized VMEM buffers.
    # Must stay a multiple of 8 (sublane) unless it equals the full extent.
    tile = max(8, min(tile_rows, ((rows + 7) // 8) * 8))

    grid = (pl.cdiv(rows, tile),)

    itemsize = jnp.dtype(orig_dtype).itemsize
    cost = pl.CostEstimate(
        flops=4 * n,                      # exp + add + div per element (rough)
        transcendentals=n,
        bytes_accessed=2 * n * itemsize,  # one read + one write pass
    )

    out2d = pl.pallas_call(
        _sigmoid_kernel,
        out_shape=jax.ShapeDtypeStruct((rows, _LANES), orig_dtype),
        grid_spec=pltpu.PrefetchScalarGridSpec(
            num_scalar_prefetch=0,
            grid=grid,
            in_specs=[pl.BlockSpec((tile, _LANES), lambda i: (i, 0))],
            out_specs=pl.BlockSpec((tile, _LANES), lambda i: (i, 0)),
        ),
        compiler_params=pltpu.CompilerParams(
            dimension_semantics=("parallel",)),
        cost_estimate=cost,
    )(x2d)

    if needs_pad:
        return out2d.reshape(-1)[:n].reshape(orig_shape)
    return out2d.reshape(orig_shape)


if __name__ == "__main__":
    key = jax.random.PRNGKey(0)

    # Primary check: NCHW input consistent with a generic forward(x).
    x = jax.random.normal(key, (2, 4, 16, 16), dtype=jnp.float32)
    y = jax.block_until_ready(sigmoid_pallas(x))
    ref = jax.nn.sigmoid(x)
    assert y.shape == x.shape and y.dtype == x.dtype
    assert jnp.allclose(y, ref, atol=1e-6, rtol=1e-6)

    # Ragged (non-lane-aligned) shape exercises the tiny-pad path.
    x2 = jax.random.normal(jax.random.PRNGKey(1), (3, 5, 7, 9), dtype=jnp.float32)
    y2 = jax.block_until_ready(sigmoid_pallas(x2))
    assert jnp.allclose(y2, jax.nn.sigmoid(x2), atol=1e-6, rtol=1e-6)

    # bf16 input: f32 internal compute, bf16 output.
    x3 = jax.random.normal(jax.random.PRNGKey(2), (2, 4, 16, 16), dtype=jnp.bfloat16)
    y3 = jax.block_until_ready(sigmoid_pallas(x3))
    assert y3.dtype == jnp.bfloat16
    assert jnp.allclose(y3.astype(jnp.float32),
                        jax.nn.sigmoid(x3.astype(jnp.float32)),
                        atol=1e-2, rtol=1e-2)

    print("KERNEL_OK")
</pallas_src>

<mosaic_0001>
module attributes {stable_mosaic.version = 11 : i64} {
  func.func @_sigmoid_kernel(%arg0: i32, %arg1: memref<16x128xf32, #tpu.memory_space<vmem>>, %arg2: memref<16x128xf32, #tpu.memory_space<vmem>>) attributes {dimension_semantics = [#tpu.dimension_semantics<parallel>], iteration_bounds = array<i64: 1>, scalar_prefetch = 0 : i64, scratch_operands = 0 : i64, tpu.core_type = #tpu.core_type<tc>, window_params = [{transform_indices = @transform_0, window_bounds = array<i64: 16, 128>}, {transform_indices = @transform_1, window_bounds = array<i64: 16, 128>}]} {
    %c0 = arith.constant 0 : index
    %c0_0 = arith.constant 0 : index
    %0 = vector.load %arg1[%c0, %c0_0] : memref<16x128xf32, #tpu.memory_space<vmem>>, vector<16x128xf32>
    %1 = arith.negf %0 : vector<16x128xf32>
    %2 = math.exp %1 : vector<16x128xf32>
    %cst = arith.constant 1.000000e+00 : f32
    %3 = vector.broadcast %cst : f32 to vector<16x128xf32>
    %4 = arith.addf %3, %2 : vector<16x128xf32>
    %5 = arith.divf %3, %4 : vector<16x128xf32>
    %c0_1 = arith.constant 0 : index
    %c0_2 = arith.constant 0 : index
    %6 = vector.load %arg2[%c0_1, %c0_2] : memref<16x128xf32, #tpu.memory_space<vmem>>, vector<16x128xf32>
    tpu.vector_store %arg2[%c0_1, %c0_2], %5 {strides = array<i32>} : memref<16x128xf32, #tpu.memory_space<vmem>>, vector<16x128xf32>,
    return
  }
  func.func @transform_0(%arg0: i32) -> (i32, i32) {
    %c0_i32 = arith.constant 0 : i32
    %c0_i32_0 = arith.constant 0 : i32
    return %arg0, %c0_i32 : i32, i32
  }
  func.func @transform_1(%arg0: i32) -> (i32, i32) {
    %c0_i32 = arith.constant 0 : i32
    %c0_i32_0 = arith.constant 0 : i32
    return %arg0, %c0_i32 : i32, i32
  }
}

</mosaic_0001>

<llo_original>
// kernel: tpu_custom_call.1
$region0: #{tpu_custom_call.1}
  #allocation0 [shape = 'u32[]', space=smem, size = 0x4, offset = 0x4, fixed_abs, tag = 'smem constant byte address 0x4 - core index']
  #allocation1 [shape = 'u32[144,128]{1,0:T(1,128)}', space=vmem, size = 0x12000, scoped, tag = 'internal scratch']
  %s0 = inlined_call_operand.hbm [shape: f32[16,128], index: 0, kind: input, shape index: {}]
  %s1 = inlined_call_operand.hbm [shape: f32[16,128], index: 1, kind: output, shape index: {}]
  %s2 = sld [smem:[#allocation0]]
  $region18: #{tpu_custom_call.1} parent=0
    _
  %s4 = ssub.s32 1, %s2
  %s5 = scalar_select 0, %s4, %s2
  $region1: #{tpu_custom_call.1} parent=0
    #allocation2 [shape = 'u8[8192]{0}', space=vmem, size = 0x2000, scoped, tag = 'input window, operand 0, single buffered']
    #allocation3 [shape = 's32[1]{0}', space=sflag, size = 0x4, scoped, tag = 'scoped memory for tpu_custom_call.1']
    #allocation4 [shape = 's32[1]{0}', space=sflag, size = 0x4, scoped, tag = 'scoped memory for tpu_custom_call.1']
    #allocation5 [shape = 'u8[8192]{0}', space=vmem, size = 0x2000, scoped, tag = 'output window, operand 0, single buffered']
    %6 = vsyncpa [#allocation3], 0
    %7 = vsyncpa [#allocation4], 0
    // Predicated region
    $region2: #{tpu_custom_call.1} parent=1 // pred_check
      _
    $region3: #{tpu_custom_call.1} parent=1 // pred_check_branch
      %9 = sbr.rel (0) target = $region5
    $region4: #{tpu_custom_call.1} parent=1 // pred_region
      %s11 = ssub.s32 256, 256
      %12 = vsyncadd [#allocation3], %s11
      %s13 = sshll.u32 [#allocation2], 4
      %s14 = int_to_ptr.vmem [resolvable:$true] %s13
      %19 = dma.hbm_to_vmem [thread:$0]  %s0, 256, %s14, [#allocation3], 128, 128, 8
    $region5: #{tpu_custom_call.1} parent=1 // pred_fallthru
      _
    // Predicated region
    $region6: #{tpu_custom_call.1} parent=1 // pred_check
      _
    $region7: #{tpu_custom_call.1} parent=1 // pred_check_branch
      %21 = sbr.rel (0) target = $region9
    $region8: #{tpu_custom_call.1} parent=1 // pred_region
      %22 = dma.done [#allocation3], 256
    $region9: #{tpu_custom_call.1} parent=1 // pred_fallthru
      _
    %v23 = vld [vmem:[#allocation2] sm:$0xff]
    %v24 = vld [vmem:[#allocation2 + $0x8] sm:$0xff]
    %v25 = vxor.u32 %v23, 2147483648
    %v26 = vxor.u32 %v24, 2147483648
    %v27 = vmul.f32 %v25, 1.442695
    %v28 = vpow.pop %v27
    %v29 = vmul.f32 %v26, 1.442695
    %v30 = vpow.pop %v29
    %v31 = vadd.f32 %v28, 1.0
    %v32 = vadd.f32 %v30, 1.0
    %v33 = vrcp.pop %v31
    %v34 = vmul.f32 1.0, %v33
    %v35 = vrcp.pop %v32
    %v36 = vmul.f32 1.0, %v35
    %37 = vst [vmem:[#allocation5] sm:$0xff] %v34
    %38 = vst [vmem:[#allocation5 + $0x8] sm:$0xff] %v36
    // Predicated region
    $region10: #{tpu_custom_call.1} parent=1 // pred_check
      _
    $region11: #{tpu_custom_call.1} parent=1 // pred_check_branch
      %40 = sbr.rel (0) target = $region13
    $region12: #{tpu_custom_call.1} parent=1 // pred_region
      %s42 = ssub.s32 256, 256
      %43 = vsyncadd [#allocation4], %s42
      %s44 = sshll.u32 [#allocation5], 4
      %s45 = int_to_ptr.vmem [resolvable:$true] %s44
      %50 = dma.vmem_to_hbm [thread:$0]  %s45, 256, %s1, [#allocation4], 128, 128, 8
    $region13: #{tpu_custom_call.1} parent=1 // pred_fallthru
      _
    // Predicated region
    $region14: #{tpu_custom_call.1} parent=1 // pred_check
      _
    $region15: #{tpu_custom_call.1} parent=1 // pred_check_branch
      %52 = sbr.rel (0) target = $region17
    $region16: #{tpu_custom_call.1} parent=1 // pred_region
      %53 = dma.done [#allocation4], 256
    $region17: #{tpu_custom_call.1} parent=1 // pred_fallthru
      _
    %54 = vsyncpa [#allocation3], 1
    %55 = vsyncpa [#allocation4], 1

</llo_original>
